<compile_context>
chip_gen: v5e
topology: v5e:2x2
jax: 0.10.0
libtpu: 0.0.40
codegen_flags: <defaults>
</compile_context>

<pallas_src>
import numpy as np
import jax
import jax.numpy as jnp
from jax.experimental import pallas as pl
from jax.experimental.pallas import tpu as pltpu

# ---------------- MelSpectrogram constants (torchaudio defaults) ----------------
SAMPLE_RATE = 16000
N_FFT = 400
WIN_LENGTH = 400
HOP_LENGTH = 160
N_MELS = 128
N_FREQS = N_FFT // 2 + 1          # 201 (onesided)
F_MIN = 0.0
F_MAX = SAMPLE_RATE / 2.0

N_FREQ_PAD = 256                  # 201 -> 256 (lane multiple); padded cols are zero
T_TILE_MAX = 256                  # frames processed per grid step


def _hz_to_mel(f):
    return 2595.0 * np.log10(1.0 + f / 700.0)


def _mel_to_hz(m):
    return 700.0 * (10.0 ** (m / 2595.0) - 1.0)


def _mel_filterbank_padded():
    """torchaudio.functional.melscale_fbanks(201, 0, 8000, 128, 16000, norm=None,
    mel_scale='htk'), zero-padded to (N_FREQ_PAD, N_MELS)."""
    all_freqs = np.linspace(0.0, SAMPLE_RATE // 2, N_FREQS)
    m_pts = np.linspace(_hz_to_mel(F_MIN), _hz_to_mel(F_MAX), N_MELS + 2)
    f_pts = _mel_to_hz(m_pts)
    f_diff = f_pts[1:] - f_pts[:-1]                          # (n_mels+1,)
    slopes = f_pts[None, :] - all_freqs[:, None]             # (n_freqs, n_mels+2)
    down = (-1.0 * slopes[:, :-2]) / f_diff[:-1]
    up = slopes[:, 2:] / f_diff[1:]
    fb = np.maximum(0.0, np.minimum(down, up))               # (201, 128)
    fb_p = np.zeros((N_FREQ_PAD, N_MELS), np.float32)
    fb_p[:N_FREQS, :] = fb
    return fb_p


def _fused_windowed_dft():
    """Single (N_FFT, 2*N_FREQ_PAD) RHS: cols [0,256) = cos*window, cols [256,512) =
    sin*window (zero outside the 201 real frequencies)."""
    n = np.arange(N_FFT)[:, None].astype(np.float64)
    k = np.arange(N_FREQS)[None, :].astype(np.float64)
    window = 0.5 * (1.0 - np.cos(2.0 * np.pi * np.arange(N_FFT) / N_FFT))  # periodic hann
    ang = 2.0 * np.pi * n * k / N_FFT
    cw = np.cos(ang) * window[:, None]
    sw = np.sin(ang) * window[:, None]
    m = np.zeros((N_FFT, 2 * N_FREQ_PAD), np.float32)
    m[:, :N_FREQS] = cw
    m[:, N_FREQ_PAD:N_FREQ_PAD + N_FREQS] = sw
    return m


# ------------------------------- Pallas kernel ----------------------------------
def melspec_kernel(frames_ref, cwsw_ref, fb_ref, out_ref):
    # frames_ref: (1, T_TILE, N_FFT) bf16 (hann window folded into cwsw)
    # cwsw_ref  : (N_FFT, 2*N_FREQ_PAD) bf16   fb_ref: (N_FREQ_PAD, N_MELS) f32
    fr = frames_ref[0]                                        # (T_TILE, N_FFT)
    reim = jnp.dot(fr, cwsw_ref[...],
                   preferred_element_type=jnp.float32)        # (T_TILE, 512) f32 acc
    re = reim[:, :N_FREQ_PAD]                                 # vreg-aligned 256 split
    im = reim[:, N_FREQ_PAD:]
    power = re * re + im * im                                 # |STFT|^2  (power=2.0)
    mel = jnp.dot(power, fb_ref[...],
                  preferred_element_type=jnp.float32)         # (T_TILE, N_MELS)
    out_ref[0] = mel


# --------------------------------- wrapper --------------------------------------
def log_mel_spec(x):
    """x: (B, time) float32 waveform -> (B, n_mels, n_frames) float32.
    Matches torchaudio.transforms.MelSpectrogram(sample_rate=16000, n_mels=128,
    hop_length=160)(x) (linear power mel spectrogram; the module applies no log)."""
    B, time = x.shape
    n_frames = 1 + time // HOP_LENGTH

    # frame-axis tiling (static, derived from shapes)
    t_tile = min(T_TILE_MAX, ((n_frames + 15) // 16) * 16)    # mult of 16 (bf16 sublane)
    t_pad = ((n_frames + t_tile - 1) // t_tile) * t_tile
    n_tiles = t_pad // t_tile

    # center=True, pad_mode='reflect'
    # TODO(synk): reflect padding requires time > n_fft//2 (=200); very short clips unsupported.
    pad_half = N_FFT // 2
    padded = jnp.pad(x, ((0, 0), (pad_half, pad_half)), mode="reflect")
    plen = time + 2 * pad_half

    # Framing without XLA gather: reshape to HOP-sized rows; frame t is
    # rows[t] ++ rows[t+1] ++ rows[t+2][:80]  (400 = 160 + 160 + 80).
    n_rows = max(-(-plen // HOP_LENGTH), n_frames + 2)
    padded = jnp.pad(padded, ((0, 0), (0, n_rows * HOP_LENGTH - plen)))
    rows = padded.reshape(B, n_rows, HOP_LENGTH)
    frames = jnp.concatenate(
        [rows[:, 0:n_frames, :],
         rows[:, 1:n_frames + 1, :],
         rows[:, 2:n_frames + 2, : N_FFT - 2 * HOP_LENGTH]],
        axis=-1)                                              # (B, n_frames, 400)
    frames = jnp.pad(frames, ((0, 0), (0, t_pad - n_frames), (0, 0)))
    frames = frames.astype(jnp.bfloat16)                      # bf16 operands, f32 acc

    cwsw = jnp.asarray(_fused_windowed_dft(), dtype=jnp.bfloat16)
    fb = jnp.asarray(_mel_filterbank_padded())                # keep fb / mel matmul f32

    out = pl.pallas_call(
        melspec_kernel,
        out_shape=jax.ShapeDtypeStruct((B, t_pad, N_MELS), jnp.float32),
        grid_spec=pltpu.PrefetchScalarGridSpec(
            num_scalar_prefetch=0,
            grid=(B, n_tiles),
            in_specs=[
                # frames: tiled over (batch, frame-tile); last dim = full 400 (exempt)
                pl.BlockSpec((1, t_tile, N_FFT), lambda b, t: (b, t, 0)),
                # fused DFT weights + mel filterbank stay resident across the grid
                pl.BlockSpec((N_FFT, 2 * N_FREQ_PAD), lambda b, t: (0, 0)),
                pl.BlockSpec((N_FREQ_PAD, N_MELS), lambda b, t: (0, 0)),
            ],
            out_specs=pl.BlockSpec((1, t_tile, N_MELS), lambda b, t: (b, t, 0)),
        ),
        compiler_params=pltpu.CompilerParams(
            dimension_semantics=("parallel", "parallel")),
    )(frames, cwsw, fb)

    # drop padded frames, transpose to torchaudio layout (B, n_mels, n_frames)
    return jnp.transpose(out[:, :n_frames, :], (0, 2, 1))


if __name__ == "__main__":
    key = jax.random.PRNGKey(0)
    B, TIME = 2, 1600                                         # 0.1 s of 16 kHz audio
    x = jax.random.normal(key, (B, TIME), dtype=jnp.float32)

    mel = jax.jit(log_mel_spec)(x)
    jax.block_until_ready(mel)

    n_frames = 1 + TIME // HOP_LENGTH
    assert mel.shape == (B, N_MELS, n_frames), mel.shape
    assert mel.dtype == jnp.float32
    assert bool(jnp.all(jnp.isfinite(mel)))
    assert bool(jnp.all(mel >= 0.0))                          # power spectrogram is >= 0
    print("KERNEL_OK")
</pallas_src>

<mosaic_0001>
module attributes {stable_mosaic.version = 11 : i64} {
  func.func @melspec_kernel(%arg0: i32, %arg1: i32, %arg2: memref<1x16x400xbf16, #tpu.memory_space<vmem>>, %arg3: memref<400x512xbf16, #tpu.memory_space<vmem>>, %arg4: memref<256x128xf32, #tpu.memory_space<vmem>>, %arg5: memref<1x16x128xf32, #tpu.memory_space<vmem>>) attributes {dimension_semantics = [#tpu.dimension_semantics<parallel>, #tpu.dimension_semantics<parallel>], iteration_bounds = array<i64: 2, 1>, scalar_prefetch = 0 : i64, scratch_operands = 0 : i64, tpu.core_type = #tpu.core_type<tc>, window_params = [{transform_indices = @transform_0, window_bounds = array<i64: 1, 16, 400>}, {pipeline_mode = #tpu.pipeline_mode<synchronous>, transform_indices = @transform_1, window_bounds = array<i64: 400, 512>}, {pipeline_mode = #tpu.pipeline_mode<synchronous>, transform_indices = @transform_2, window_bounds = array<i64: 256, 128>}, {transform_indices = @transform_3, window_bounds = array<i64: 1, 16, 128>}]} {
    %c0 = arith.constant 0 : index
    %c0_0 = arith.constant 0 : index
    %c0_1 = arith.constant 0 : index
    %0 = vector.load %arg2[%c0, %c0_0, %c0_1] : memref<1x16x400xbf16, #tpu.memory_space<vmem>>, vector<1x16x400xbf16>
    %1 = vector.shape_cast %0 : vector<1x16x400xbf16> to vector<16x400xbf16>
    %c0_2 = arith.constant 0 : index
    %c0_3 = arith.constant 0 : index
    %2 = vector.load %arg3[%c0_2, %c0_3] : memref<400x512xbf16, #tpu.memory_space<vmem>>, vector<400x512xbf16>
    %cst = arith.constant dense<0.000000e+00> : vector<16x512xf32>
    %3 = tpu.matmul %1, %2, %cst {dimension_numbers = #tpu.dot_dimension_numbers<[1], [0], [0], [1], [0, 0, 1, 1], [], []>} : vector<16x400xbf16>, vector<400x512xbf16>, vector<16x512xf32> -> vector<16x512xf32>
    %4 = vector.extract_strided_slice %3 {offsets = [0, 0], sizes = [16, 256], strides = [1, 1]} : vector<16x512xf32> to vector<16x256xf32>
    %5 = vector.extract_strided_slice %3 {offsets = [0, 256], sizes = [16, 256], strides = [1, 1]} : vector<16x512xf32> to vector<16x256xf32>
    %6 = arith.mulf %4, %4 : vector<16x256xf32>
    %7 = arith.mulf %5, %5 : vector<16x256xf32>
    %8 = arith.addf %6, %7 : vector<16x256xf32>
    %c0_4 = arith.constant 0 : index
    %c0_5 = arith.constant 0 : index
    %9 = vector.load %arg4[%c0_4, %c0_5] : memref<256x128xf32, #tpu.memory_space<vmem>>, vector<256x128xf32>
    %cst_6 = arith.constant dense<0.000000e+00> : vector<16x128xf32>
    %10 = tpu.matmul %8, %9, %cst_6 {dimension_numbers = #tpu.dot_dimension_numbers<[1], [0], [0], [1], [0, 0, 1, 1], [], []>} : vector<16x256xf32>, vector<256x128xf32>, vector<16x128xf32> -> vector<16x128xf32>
    %c0_7 = arith.constant 0 : index
    %c0_8 = arith.constant 0 : index
    %c0_9 = arith.constant 0 : index
    %11 = vector.load %arg5[%c0_7, %c0_8, %c0_9] : memref<1x16x128xf32, #tpu.memory_space<vmem>>, vector<1x16x128xf32>
    %12 = vector.shape_cast %11 : vector<1x16x128xf32> to vector<16x128xf32>
    %13 = vector.shape_cast %10 : vector<16x128xf32> to vector<1x16x128xf32>
    tpu.vector_store %arg5[%c0_7, %c0_8, %c0_9], %13 {strides = array<i32>} : memref<1x16x128xf32, #tpu.memory_space<vmem>>, vector<1x16x128xf32>,
    return
  }
  func.func @transform_0(%arg0: i32, %arg1: i32) -> (i32, i32, i32) {
    %c0_i32 = arith.constant 0 : i32
    %c0_i32_0 = arith.constant 0 : i32
    return %arg0, %arg1, %c0_i32 : i32, i32, i32
  }
  func.func @transform_1(%arg0: i32, %arg1: i32) -> (i32, i32) {
    %c0_i32 = arith.constant 0 : i32
    %c0_i32_0 = arith.constant 0 : i32
    %c0_i32_1 = arith.constant 0 : i32
    return %c0_i32, %c0_i32_0 : i32, i32
  }
  func.func @transform_2(%arg0: i32, %arg1: i32) -> (i32, i32) {
    %c0_i32 = arith.constant 0 : i32
    %c0_i32_0 = arith.constant 0 : i32
    %c0_i32_1 = arith.constant 0 : i32
    return %c0_i32, %c0_i32_0 : i32, i32
  }
  func.func @transform_3(%arg0: i32, %arg1: i32) -> (i32, i32, i32) {
    %c0_i32 = arith.constant 0 : i32
    %c0_i32_0 = arith.constant 0 : i32
    return %arg0, %arg1, %c0_i32 : i32, i32, i32
  }
}

</mosaic_0001>

<llo_original>
// kernel: reverse.1
$region0: #{reverse.1}
  %s0 = inlined_call_operand.vmem [shape: bf16[2,256], index: 0, kind: input, shape index: {}]
  %s1 = inlined_call_operand.vmem [shape: bf16[2,256], index: 1, kind: output, shape index: {}]
  %v2 = vlaneseq
  %v3 = vsub.s32 127, %v2
  %4 = vset.pattern.permute.xlu0 %v3
  $region1: #{reverse.1} parent=0
    #allocation0 [shape = 'u8[4096]{0}', space=vmem, size = 0x1000, scoped, tag = 'operand span for operand 0']
    #allocation1 [shape = 'u8[1024]{0}', space=vmem, size = 0x400, scoped, tag = 'packed  for operand 0']
    #allocation2 [shape = 'u8[4096]{0}', space=vmem, size = 0x1000, scoped, tag = 'operand span for operand 1']
    #allocation3 [shape = 'u8[1024]{0}', space=vmem, size = 0x400, scoped, tag = 'packed  for operand 1']
    loop: start=0, step=1, limit=4
    $region2: #{reverse.1} parent=1 // loop_pre_header
      _
    $region3: #{reverse.1} parent=1 // loop_header
      %s6 = sphi 0, %s10
      %p7 = scmp.ge.s32.totalorder %s6, 4
      %s13 = sphi 0, %s25
      %s14 = sphi 0, %s21
      %s15 = sphi 0, %s13
      %s16 = sphi 0, %s14
      %s17 = sphi 0, %s15
      %s18 = sphi 0, %s16
    $region4: #{reverse.1} parent=1 // loop_header_branch
      %9 = sbr.rel (%p7) target = $region8
    $region5: #{reverse.1} parent=1 // loop_body
      %s11 = ssub.s32 %s6, 1
      %s12 = ssub.s32 %s6, 2
      %s19 = sadd.s32 1, %s14
      %p20 = scmp.ge.s32.totalorder %s19, 2
      %s21 = scalar_select %p20, 0, %s19
      %s22 = sadd.s32 1, %s13
      %s23 = scalar_select %p20, %s22, %s13
      %p24 = scmp.ge.s32.totalorder %s23, 1
      %s25 = scalar_select %p24, 0, %s23
      %p26 = scmp.le.s32.totalorder 1, %s6
      %p27 = scmp.lt.s32.totalorder %s6, 3
      %p28 = pnand %p26, %p27
      %p29 = pneg %p28
      // Predicated region
      $region9: #{reverse.1} parent=5 // pred_check
        _
      $region10: #{reverse.1} parent=5 // pred_check_branch
        %31 = sbr.rel (%p28) target = $region12
      $region11: #{reverse.1} parent=5 // pred_region
        %s32 = ssub.s32 %s6, 1
      $region12: #{reverse.1} parent=5 // pred_fallthru
        _
      %p33 = scmp.lt.s32.totalorder %s6, 2
      // Predicated region
      $region13: #{reverse.1} parent=5 // pred_check
        %p34 = pneg %p33
      $region14: #{reverse.1} parent=5 // pred_check_branch
        %36 = sbr.rel (%p34) target = $region16
      $region15: #{reverse.1} parent=5 // pred_region
        %s37 = sand.u32 %s6, 1
        %s38 = sand.u32 %s6, 1
        %s39 = scalar_lea.vmem [#allocation1], %s38
        %s40 = ssub.s32 1, %s14
        %s41 = smul.addr %s13, 2
        %s42 = sadd.s32 %s40, %s41
        %s43 = scalar_lea.vmem %s0, %s42
        // Predicated region
        $region17: #{reverse.1} parent=15 // pred_check
          _
        $region18: #{reverse.1} parent=15 // pred_check_branch
          %45 = sbr.rel (0) target = $region20
        $region19: #{reverse.1} parent=15 // pred_region
          // Predicated region
          $region21: #{reverse.1} parent=19 // pred_check
            _
          $region22: #{reverse.1} parent=19 // pred_check_branch
            %47 = sbr.rel target = $region24
          $region23: #{reverse.1} parent=19 // pred_region
            // Predicated region
            $region36: #{reverse.1} parent=23 // pred_check
              _
            $region37: #{reverse.1} parent=23 // pred_check_branch
              %63 = sbr.rel (0) target = $region39
            $region38: #{reverse.1} parent=23 // pred_region
              %s65 = ssub.s32 2, 1
              loop: start=0, step=1, limit=1
              $region40: #{reverse.1} parent=38 // loop_pre_header
                _
              $region41: #{reverse.1} parent=38 // loop_header
                %s67 = sphi 0, %s71
                %p68 = scmp.ge.s32.totalorder %s67, 1
                %s72 = sphi %s43, %s43
                %s73 = sphi %s39, %s39
              $region42: #{reverse.1} parent=38 // loop_header_branch
                %70 = sbr.rel (%p68) target = $region46
              $region43: #{reverse.1} parent=38 // loop_body
                %v74 = vld [vmem:[%s72] sm:%s65]
                %75 = vst [vmem:[%s73] sm:%s65] %v74
              $region44: #{reverse.1} parent=38 // loop_footer
                %s71 = sadd.s32 1, %s67
              $region45: #{reverse.1} parent=38 // loop_footer_branch
                %66 = sbr.rel target = $region41
              $region46: #{reverse.1} parent=38 // loop_exit
                _
            $region39: #{reverse.1} parent=23 // pred_fallthru
              _
          $region24: #{reverse.1} parent=19 // pred_fallthru
            _
          // Predicated region
          $region25: #{reverse.1} parent=19 // pred_check
            _
          $region26: #{reverse.1} parent=19 // pred_check_branch
            %49 = sbr.rel (0) target = $region28
          $region27: #{reverse.1} parent=19 // pred_region
            %s51 = ssub.s32 2, 1
            loop: start=0, step=1, limit=1
            $region29: #{reverse.1} parent=27 // loop_pre_header
              _
            $region30: #{reverse.1} parent=27 // loop_header
              %s53 = sphi 0, %s57
              %p54 = scmp.ge.s32.totalorder %s53, 1
              %s58 = sphi %s43, %s43
              %s59 = sphi %s39, %s39
            $region31: #{reverse.1} parent=27 // loop_header_branch
              %56 = sbr.rel (%p54) target = $region35
            $region32: #{reverse.1} parent=27 // loop_body
              %v60 = vld [vmem:[%s58] sm:%s51]
              %61 = vst [vmem:[%s59] sm:%s51] %v60
            $region33: #{reverse.1} parent=27 // loop_footer
              %s57 = sadd.s32 1, %s53
            $region34: #{reverse.1} parent=27 // loop_footer_branch
              %52 = sbr.rel target = $region30
            $region35: #{reverse.1} parent=27 // loop_exit
              _
          $region28: #{reverse.1} parent=19 // pred_fallthru
            _
        $region20: #{reverse.1} parent=15 // pred_fallthru
          _
        %76 = vnop
      $region16: #{reverse.1} parent=5 // pred_fallthru
        _
      %p77 = scmp.le.s32.totalorder 1, %s6
      %p78 = scmp.lt.s32.totalorder %s6, 3
      %p79 = pnand %p77, %p78
      %p80 = pneg %p79
      // Predicated region
      $region47: #{reverse.1} parent=5 // pred_check
        _
      $region48: #{reverse.1} parent=5 // pred_check_branch
        %82 = sbr.rel (%p79) target = $region50
      $region49: #{reverse.1} parent=5 // pred_region
        %s83 = ssub.s32 %s6, 1
        %s84 = sand.u32 %s11, 1
        %s85 = sand.u32 %s11, 1
        %s86 = scalar_lea.vmem [#allocation1], %s85
        %s87 = sand.u32 %s11, 1
        %s88 = sand.u32 %s11, 1
        %s89 = scalar_lea.vmem [#allocation1], %s88
        %s90 = sand.u32 %s11, 1
        %s91 = sand.u32 %s11, 1
        %s92 = scalar_lea.vmem [#allocation3], %s91
        %s94 = ssub.s32 4, 1
        %s95 = sshrl.u32 %s94, 1
        %s96 = sor.u32 %s94, %s95
        %s97 = sand.u32 %s96, 85
        %s98 = sshrl.u32 %s97, 1
        %s99 = sor.u32 %s97, %s98
        %s100 = sand.u32 51, %s99
        %s101 = sshrl.u32 %s100, 2
        %s102 = sor.u32 %s100, %s101
        %s103 = sand.u32 15, %s102
        %v104 = vld [vmem:[%s89] sm:%s103]
        %v105 = vunpack.c.l.bf16 %v104
        %v106 = vunpack.c.h.bf16 %v104
        %107 = vst [vmem:[#allocation0] sm:%s94] %v105
        %s108 = ssub.s32 1, %s16
        %v109 = vld [vmem:[#allocation0] sm:$0xff]
        %110 = vperm.xlu0 %4, %v109
        %v111 = vpop.permute.xlu0 %110
        %112 = vst [vmem:[#allocation2] sm:$0xff] %v111
        %s114 = ssub.s32 4, 1
        %v115 = vld [vmem:[#allocation2] sm:%s114]
        %v116 = vpack.c.bf16 0.0, %v115
        %s118 = ssub.s32 2, 1
        %119 = vst [vmem:[%s92] sm:%s118] %v116
        %s120 = sand.u32 %s11, 1
        %s121 = sand.u32 %s11, 1
        %s122 = scalar_lea.vmem [#allocation3], %s121
        %s123 = smul.addr %s15, 2
        %s124 = sadd.s32 %s16, %s123
        %s125 = scalar_lea.vmem %s1, %s124
        // Predicated region
        $region51: #{reverse.1} parent=49 // pred_check
          _
        $region52: #{reverse.1} parent=49 // pred_check_branch
          %127 = sbr.rel (0) target = $region54
        $region53: #{reverse.1} parent=49 // pred_region
          // Predicated region
          $region55: #{reverse.1} parent=53 // pred_check
            _
          $region56: #{reverse.1} parent=53 // pred_check_branch
            %129 = sbr.rel target = $region58
          $region57: #{reverse.1} parent=53 // pred_region
            // Predicated region
            $region70: #{reverse.1} parent=57 // pred_check
              _
            $region71: #{reverse.1} parent=57 // pred_check_branch
              %145 = sbr.rel (0) target = $region73
            $region72: #{reverse.1} parent=57 // pred_region
              %s147 = ssub.s32 2, 1
              loop: start=0, step=1, limit=1
              $region74: #{reverse.1} parent=72 // loop_pre_header
                _
              $region75: #{reverse.1} parent=72 // loop_header
                %s149 = sphi 0, %s153
                %p150 = scmp.ge.s32.totalorder %s149, 1
                %s154 = sphi %s122, %s122
                %s155 = sphi %s125, %s125
              $region76: #{reverse.1} parent=72 // loop_header_branch
                %152 = sbr.rel (%p150) target = $region80
              $region77: #{reverse.1} parent=72 // loop_body
                %v156 = vld [vmem:[%s154] sm:%s147]
                %157 = vst [vmem:[%s155] sm:%s147] %v156
              $region78: #{reverse.1} parent=72 // loop_footer
                %s153 = sadd.s32 1, %s149
              $region79: #{reverse.1} parent=72 // loop_footer_branch
                %148 = sbr.rel target = $region75
              $region80: #{reverse.1} parent=72 // loop_exit
                _
            $region73: #{reverse.1} parent=57 // pred_fallthru
              _
          $region58: #{reverse.1} parent=53 // pred_fallthru
            _
          // Predicated region
          $region59: #{reverse.1} parent=53 // pred_check
            _
          $region60: #{reverse.1} parent=53 // pred_check_branch
            %131 = sbr.rel (0) target = $region62
          $region61: #{reverse.1} parent=53 // pred_region
            %s133 = ssub.s32 2, 1
            loop: start=0, step=1, limit=1
            $region63: #{reverse.1} parent=61 // loop_pre_header
              _
            $region64: #{reverse.1} parent=61 // loop_header
              %s135 = sphi 0, %s139
              %p136 = scmp.ge.s32.totalorder %s135, 1
              %s140 = sphi %s122, %s122
              %s141 = sphi %s125, %s125
            $region65: #{reverse.1} parent=61 // loop_header_branch
              %138 = sbr.rel (%p136) target = $region69
            $region66: #{reverse.1} parent=61 // loop_body
              %v142 = vld [vmem:[%s140] sm:%s133]
              %143 = vst [vmem:[%s141] sm:%s133] %v142
            $region67: #{reverse.1} parent=61 // loop_footer
              %s139 = sadd.s32 1, %s135
            $region68: #{reverse.1} parent=61 // loop_footer_branch
              %134 = sbr.rel target = $region64
            $region69: #{reverse.1} parent=61 // loop_exit
              _
          $region62: #{reverse.1} parent=53 // pred_fallthru
            _
        $region54: #{reverse.1} parent=49 // pred_fallthru
          _
        %158 = vnop
      $region50: #{reverse.1} parent=5 // pred_fallthru
        _
      %p159 = scmp.le.s32.totalorder 2, %s6
      // Predicated region
      $region81: #{reverse.1} parent=5 // pred_check
        %p160 = pneg %p159
      $region82: #{reverse.1} parent=5 // pred_check_branch
        %162 = sbr.rel (%p160) target = $region84
      $region83: #{reverse.1} parent=5 // pred_region
        %s163 = ssub.s32 %s6, 2
        %s164 = sand.u32 %s12, 1
        %s165 = sand.u32 %s12, 1
        %s166 = scalar_lea.vmem [#allocation3], %s165
      $region84: #{reverse.1} parent=5 // pred_fallthru
        _
    $region6: #{reverse.1} parent=1 // loop_footer
      %s10 = sadd.s32 1, %s6
    $region7: #{reverse.1} parent=1 // loop_footer_branch
      %5 = sbr.rel target = $region3
    $region8: #{reverse.1} parent=1 // loop_exit
      _

</llo_original>
